<compile_context>
chip_gen: v7x
topology: tpu7x:2x2x1
jax: 0.10.0
libtpu: 0.0.40
codegen_flags: <defaults>
</compile_context>

<pallas_src>
import functools

import jax
import jax.numpy as jnp
from jax import lax
from jax.experimental import pallas as pl
from jax.experimental.pallas import tpu as pltpu

_LW = 128          # lane width of every tile
_ACC_R = 8         # sublane rows of the accumulator tiles


def _vmem_limit_bytes():
    """Generation-aware VMEM budget with a conservative fallback."""
    cap = 64 * 1024 * 1024
    try:
        info = pltpu.get_tpu_info()
        c = getattr(info, "vmem_capacity_bytes", None)
        if c:
            cap = int(c)
    except Exception:
        pass
    return min((3 * cap) // 4, 96 * 1024 * 1024)


def _pick_row_tiling(s_rows, bytes_per_rowgroup, vmem_limit):
    """Pick (rows_blk, chunk_rows, n_blocks, partitions) for the row axis."""
    if s_rows <= _ACC_R:
        return s_rows, s_rows, 1, 1
    chunk = 32 if s_rows >= 32 else _ACC_R
    # Inputs are double-buffered -> aim for ~1/3 of the VMEM limit per step.
    budget = max(vmem_limit // 3, chunk * bytes_per_rowgroup)
    rows_blk = (budget // max(bytes_per_rowgroup, 1)) // chunk * chunk
    rows_blk = max(chunk, min(rows_blk, (s_rows // chunk) * chunk))
    n_blocks = -(-s_rows // rows_blk)
    parts = 2 if n_blocks >= 2 else 1
    return rows_blk, chunk, n_blocks, parts


def _fold_rows(x, acc_rows):
    """Sum groups of `acc_rows` sublane rows (pure vreg-to-vreg VPU adds)."""
    r = x.shape[0]
    if r <= acc_rows:
        return x
    out = x[0:acc_rows, :]
    for s in range(acc_rows, r, acc_rows):
        out = out + x[s:s + acc_rows, :]
    return out


def _streamed_reduction(chunk_body, init_body, *, s_rows, rows_blk, chunk_rows,
                        blocks_per_part, mask_needed, unroll):
    """Common driver: zero-init, full/tail block split, chunked fori_loop."""
    part = pl.program_id(1)
    j = pl.program_id(2)

    @pl.when(j == 0)
    def _():
        init_body()

    blk = part * blocks_per_part + j          # global row-block index
    limit = s_rows - blk * rows_blk           # number of valid rows here
    n_chunks = rows_blk // chunk_rows

    def run(masked):
        row_ids = (lax.broadcasted_iota(jnp.int32, (chunk_rows, _LW), 0)
                   if masked else None)

        def step(r0, off):
            valid = (row_ids < (limit - off)) if masked else None
            chunk_body(r0, valid)

        if n_chunks == 1:
            step(0, 0)
        else:
            def body(t, carry):
                off = t * chunk_rows
                step(pl.multiple_of(off, chunk_rows), off)
                return carry
            lax.fori_loop(0, n_chunks, body, 0, unroll=unroll)

    if mask_needed:
        @pl.when(limit >= rows_blk)                       # full block: no mask
        def _():
            run(False)

        @pl.when(jnp.logical_and(limit > 0, limit < rows_blk))   # tail block
        def _():
            run(True)
        # limit <= 0 (duplicate partition-padding block): contributes nothing.
    else:
        run(False)


# ----------------------------------------------------------------------------
# Kernel A (fused one-hot): prediction (N, C, S_rows, 128) + labels (N, S_rows, 128)
# ----------------------------------------------------------------------------
def _dice_label_kernel(pred_ref, lab_ref, inter_ref, psq_ref, gcnt_ref, *,
                       gt_values, s_rows, rows_blk, chunk_rows,
                       blocks_per_part, mask_needed, unroll):
    acc_rows = min(_ACC_R, chunk_rows)

    def init_body():
        inter_ref[...] = jnp.zeros_like(inter_ref)
        psq_ref[...] = jnp.zeros_like(psq_ref)
        gcnt_ref[...] = jnp.zeros_like(gcnt_ref)

    if acc_rows == _ACC_R:
        def add_to(ref, c, val):
            ref[0, c] = ref[0, c] + val
    else:
        def add_to(ref, c, val):
            ref[0, c, 0:acc_rows, :] = ref[0, c, 0:acc_rows, :] + val

    def chunk_body(r0, valid):
        lab = lab_ref[0, pl.ds(r0, chunk_rows), :]              # (chunk, 128)
        for c, gv in enumerate(gt_values):
            pc = pred_ref[0, c, pl.ds(r0, chunk_rows), :].astype(jnp.float32)
            onehot = lab == gv
            if valid is not None:
                onehot = jnp.logical_and(onehot, valid)
                pc = jnp.where(valid, pc, 0.0)
            g = onehot.astype(jnp.float32)
            add_to(inter_ref, c, _fold_rows(jnp.where(onehot, pc, 0.0), acc_rows))
            add_to(psq_ref, c, _fold_rows(pc * pc, acc_rows))
            add_to(gcnt_ref, c, _fold_rows(g, acc_rows))        # g*g == g

    _streamed_reduction(chunk_body, init_body, s_rows=s_rows, rows_blk=rows_blk,
                        chunk_rows=chunk_rows, blocks_per_part=blocks_per_part,
                        mask_needed=mask_needed, unroll=unroll)


# ----------------------------------------------------------------------------
# Kernel B (GT already one-hot): two equally-shaped (R, S_rows, 128) streams
# ----------------------------------------------------------------------------
def _dice_pair_kernel(pred_ref, gt_ref, inter_ref, psq_ref, gsq_ref, *,
                      s_rows, rows_blk, chunk_rows, blocks_per_part,
                      mask_needed, unroll):
    acc_rows = min(_ACC_R, chunk_rows)

    def init_body():
        inter_ref[...] = jnp.zeros_like(inter_ref)
        psq_ref[...] = jnp.zeros_like(psq_ref)
        gsq_ref[...] = jnp.zeros_like(gsq_ref)

    if acc_rows == _ACC_R:
        def add_to(ref, val):
            ref[0] = ref[0] + val
    else:
        def add_to(ref, val):
            ref[0, 0:acc_rows, :] = ref[0, 0:acc_rows, :] + val

    def chunk_body(r0, valid):
        p = pred_ref[0, pl.ds(r0, chunk_rows), :].astype(jnp.float32)
        g = gt_ref[0, pl.ds(r0, chunk_rows), :].astype(jnp.float32)
        if valid is not None:
            p = jnp.where(valid, p, 0.0)
            g = jnp.where(valid, g, 0.0)
        add_to(inter_ref, _fold_rows(p * g, acc_rows))
        add_to(psq_ref, _fold_rows(p * p, acc_rows))
        add_to(gsq_ref, _fold_rows(g * g, acc_rows))

    _streamed_reduction(chunk_body, init_body, s_rows=s_rows, rows_blk=rows_blk,
                        chunk_rows=chunk_rows, blocks_per_part=blocks_per_part,
                        mask_needed=mask_needed, unroll=unroll)


# ----------------------------------------------------------------------------
# pallas_call wrappers
# ----------------------------------------------------------------------------
def _dice_sums_from_labels(pred, labels, gt_values):
    """pred: (N, C, S) native dtype; labels: (N, S) native dtype.
    Returns (intersection, pred_sq_sum, gt_count), each (N, C) float32."""
    N, C, S = pred.shape
    lane_pad = (-S) % _LW
    if lane_pad:
        # TODO(synk): rare-path HBM copy; avoided whenever D*H*W % 128 == 0.
        pred = jnp.pad(pred, ((0, 0), (0, 0), (0, lane_pad)))
        labels = jnp.pad(labels, ((0, 0), (0, lane_pad)),
                         constant_values=labels.dtype.type(gt_values[0]))
    sp = S + lane_pad
    s_rows = sp // _LW
    pred4 = pred.reshape(N, C, s_rows, _LW)
    lab3 = labels.reshape(N, s_rows, _LW)
    if s_rows < 32 and lab3.dtype.itemsize < 4:
        # tiny inputs only: widen so sub-32-bit tiles stay slice-aligned
        lab3 = lab3.astype(jnp.int32 if jnp.issubdtype(lab3.dtype, jnp.integer)
                           else jnp.float32)

    vmem_limit = _vmem_limit_bytes()
    bytes_per_rowgroup = _LW * (C * pred4.dtype.itemsize + lab3.dtype.itemsize)
    rows_blk, chunk_rows, n_blocks, parts = _pick_row_tiling(
        s_rows, bytes_per_rowgroup, vmem_limit)
    blocks_per_part = -(-n_blocks // parts)
    mask_needed = (s_rows % rows_blk != 0) or (blocks_per_part * parts != n_blocks)
    unroll = 2 if rows_blk // chunk_rows > 1 else 1

    kernel = functools.partial(
        _dice_label_kernel, gt_values=tuple(gt_values), s_rows=s_rows,
        rows_blk=rows_blk, chunk_rows=chunk_rows,
        blocks_per_part=blocks_per_part, mask_needed=mask_needed, unroll=unroll)

    def pred_map(n, p, j):
        return (n, 0, jnp.minimum(p * blocks_per_part + j, n_blocks - 1), 0)

    def lab_map(n, p, j):
        return (n, jnp.minimum(p * blocks_per_part + j, n_blocks - 1), 0)

    def out_map(n, p, j):
        return (n * parts + p, 0, 0, 0)

    out_shape = [jax.ShapeDtypeStruct((N * parts, C, _ACC_R, _LW), jnp.float32)] * 3
    out_spec = pl.BlockSpec((1, C, _ACC_R, _LW), out_map)

    cost = pl.CostEstimate(
        flops=7 * N * C * sp,
        transcendentals=0,
        bytes_accessed=int(pred4.size * pred4.dtype.itemsize
                           + lab3.size * lab3.dtype.itemsize
                           + 3 * N * parts * C * _ACC_R * _LW * 4))

    inter, psq, gcnt = pl.pallas_call(
        kernel,
        out_shape=out_shape,
        grid_spec=pltpu.PrefetchScalarGridSpec(
            num_scalar_prefetch=0,
            grid=(N, parts, blocks_per_part),
            in_specs=[pl.BlockSpec((1, C, rows_blk, _LW), pred_map),
                      pl.BlockSpec((1, rows_blk, _LW), lab_map)],
            out_specs=[out_spec, out_spec, out_spec]),
        compiler_params=pltpu.CompilerParams(
            dimension_semantics=("parallel", "parallel", "arbitrary"),
            vmem_limit_bytes=vmem_limit),
        cost_estimate=cost,
    )(pred4, lab3)

    def _reduce(x):
        return jnp.sum(x.reshape(N, parts, C, _ACC_R, _LW), axis=(1, 3, 4))

    inter, psq, gcnt = _reduce(inter), _reduce(psq), _reduce(gcnt)
    if lane_pad:
        # padded label lanes carry gt_values[0] -> class 0 count over-counted
        gcnt = gcnt.at[:, 0].add(-float(lane_pad))
    return inter, psq, gcnt


def _dice_sums_from_onehot(pred, gt):
    """pred, gt: (N, C, S) native dtype -> (inter, psq, gsq), each (N, C) f32."""
    N, C, S = pred.shape
    R = N * C
    lane_pad = (-S) % _LW
    if lane_pad:
        pred = jnp.pad(pred, ((0, 0), (0, 0), (0, lane_pad)))
        gt = jnp.pad(gt, ((0, 0), (0, 0), (0, lane_pad)))
    sp = S + lane_pad
    s_rows = sp // _LW
    pred3 = pred.reshape(R, s_rows, _LW)
    gt3 = gt.reshape(R, s_rows, _LW)

    vmem_limit = _vmem_limit_bytes()
    bytes_per_rowgroup = _LW * (pred3.dtype.itemsize + gt3.dtype.itemsize)
    rows_blk, chunk_rows, n_blocks, parts = _pick_row_tiling(
        s_rows, bytes_per_rowgroup, vmem_limit)
    blocks_per_part = -(-n_blocks // parts)
    mask_needed = (s_rows % rows_blk != 0) or (blocks_per_part * parts != n_blocks)
    unroll = 2 if rows_blk // chunk_rows > 1 else 1

    kernel = functools.partial(
        _dice_pair_kernel, s_rows=s_rows, rows_blk=rows_blk,
        chunk_rows=chunk_rows, blocks_per_part=blocks_per_part,
        mask_needed=mask_needed, unroll=unroll)

    def in_map(r, p, j):
        return (r, jnp.minimum(p * blocks_per_part + j, n_blocks - 1), 0)

    def out_map(r, p, j):
        return (r * parts + p, 0, 0)

    in_spec = pl.BlockSpec((1, rows_blk, _LW), in_map)
    out_spec = pl.BlockSpec((1, _ACC_R, _LW), out_map)
    out_shape = [jax.ShapeDtypeStruct((R * parts, _ACC_R, _LW), jnp.float32)] * 3

    cost = pl.CostEstimate(
        flops=6 * R * sp,
        transcendentals=0,
        bytes_accessed=int(pred3.size * pred3.dtype.itemsize
                           + gt3.size * gt3.dtype.itemsize
                           + 3 * R * parts * _ACC_R * _LW * 4))

    inter, psq, gsq = pl.pallas_call(
        kernel,
        out_shape=out_shape,
        grid_spec=pltpu.PrefetchScalarGridSpec(
            num_scalar_prefetch=0,
            grid=(R, parts, blocks_per_part),
            in_specs=[in_spec, in_spec],
            out_specs=[out_spec, out_spec, out_spec]),
        compiler_params=pltpu.CompilerParams(
            dimension_semantics=("parallel", "parallel", "arbitrary"),
            vmem_limit_bytes=vmem_limit),
        cost_estimate=cost,
    )(pred3, gt3)

    def _reduce(x):
        return jnp.sum(x.reshape(R, parts, _ACC_R, _LW), axis=(1, 2, 3)).reshape(N, C)

    return _reduce(inter), _reduce(psq), _reduce(gsq)


# ----------------------------------------------------------------------------
# DiceLoss (glue in plain JAX, hot-path reductions in Pallas)
# ----------------------------------------------------------------------------
def one_hot_encoding(ground_truth, gt_values, num_classes, dtype=jnp.bfloat16):
    """Labels (N, D, H, W) or (N, 1, D, H, W) -> one-hot (N, num_classes, D, H, W).
    bf16 is exact for {0, 1} and halves the HBM stream vs float32."""
    if ground_truth.ndim == 5 and ground_truth.shape[1] == 1:
        ground_truth = ground_truth[:, 0]
    gt_vals = jnp.asarray(gt_values).astype(ground_truth.dtype)[:num_classes]
    onehot = ground_truth[:, None, ...] == gt_vals[None, :, None, None, None]
    return onehot.astype(dtype)


@functools.partial(
    jax.jit,
    static_argnames=("num_classes", "eps", "is_one_hot", "gt_values",
                     "is_plot_per_channel_loss"),
)
def dice_loss(prediction, ground_truth, *, num_classes, eps=1e-6,
              is_one_hot=False, gt_values=None,
              is_plot_per_channel_loss=False):
    N, C, D, H, W = prediction.shape
    S = D * H * W

    if is_one_hot:
        pred = prediction.reshape(N, C, S)
        gt = ground_truth.reshape(N, C, S)
        intersection, psq, gsq = _dice_sums_from_onehot(pred, gt)
        union = psq + gsq
    else:
        if gt_values is None:
            raise ValueError(
                "gt_values must be provided if ground truth is not one-hot encoded.")
        labels = ground_truth
        if labels.ndim == 5 and labels.shape[1] == 1:
            labels = labels[:, 0]
        gv = tuple(gt_values)[:num_classes]
        pred = prediction.reshape(N, C, S)
        lab = labels.reshape(N, S)
        intersection, psq, count = _dice_sums_from_labels(pred, lab, gv)
        union = psq + count          # sum(onehot^2) == count of matching voxels

    dice_score_channel = (2.0 * intersection + eps) / (union + eps)
    dice_score_channel = jnp.mean(dice_score_channel, axis=0)   # (C,)
    dice_score_overall = jnp.mean(dice_score_channel)           # scalar
    dice_loss_channel = 1.0 - dice_score_channel
    dice_loss_overall = 1.0 - dice_score_overall

    if is_plot_per_channel_loss:
        return dice_loss_overall, dice_loss_channel
    return dice_loss_overall


# ----------------------------------------------------------------------------
# Demo / self-test
# ----------------------------------------------------------------------------
if __name__ == "__main__":
    key = jax.random.PRNGKey(0)

    def reference(pred, gt_oh, eps=1e-6):
        pred = pred.astype(jnp.float32)
        gt_oh = gt_oh.astype(jnp.float32)
        inter = jnp.sum(pred * gt_oh, axis=(2, 3, 4))
        union = (jnp.sum(pred ** 2, axis=(2, 3, 4))
                 + jnp.sum(gt_oh ** 2, axis=(2, 3, 4)))
        dsc = jnp.mean((2 * inter + eps) / (union + eps), axis=0)
        return 1.0 - jnp.mean(dsc), 1.0 - dsc

    def run_case(case_key, shape, num_classes):
        N, C, D, H, W = shape
        k1, k2 = jax.random.split(case_key)
        logits = jax.random.normal(k1, shape, dtype=jnp.float32)
        pred = jax.nn.softmax(logits, axis=1)
        labels = jax.random.randint(k2, (N, D, H, W), 0, num_classes).astype(jnp.int32)
        gt_values = tuple(range(num_classes))
        gt_oh = one_hot_encoding(labels, gt_values, num_classes)

        ref_overall, ref_channel = reference(pred, gt_oh)

        lo, lc = dice_loss(pred, labels, num_classes=num_classes, eps=1e-6,
                           is_one_hot=False, gt_values=gt_values,
                           is_plot_per_channel_loss=True)
        lo2, lc2 = dice_loss(pred, gt_oh, num_classes=num_classes, eps=1e-6,
                             is_one_hot=True, gt_values=None,
                             is_plot_per_channel_loss=True)
        jax.block_until_ready((lo, lc, lo2, lc2))

        assert jnp.allclose(lo, ref_overall, atol=1e-5, rtol=1e-5)
        assert jnp.allclose(lc, ref_channel, atol=1e-5, rtol=1e-5)
        assert jnp.allclose(lo2, ref_overall, atol=1e-5, rtol=1e-5)
        assert jnp.allclose(lc2, ref_channel, atol=1e-5, rtol=1e-5)

    keys = jax.random.split(key, 3)
    # Tiny volume (single full-extent block).
    run_case(keys[0], (2, 4, 4, 8, 8), 4)
    # S = 1280 -> 10 row-groups: exercises the partial tail block + 2-way partition.
    run_case(keys[1], (1, 3, 5, 16, 16), 3)
    # S = 180 -> not a multiple of 128: exercises the lane-pad fallback path.
    run_case(keys[2], (2, 2, 3, 6, 10), 2)

    # Scalar-return path.
    k1, k2 = jax.random.split(keys[0])
    pred = jax.nn.softmax(jax.random.normal(k1, (2, 4, 4, 8, 8), jnp.float32), axis=1)
    labels = jax.random.randint(k2, (2, 4, 8, 8), 0, 4).astype(jnp.int32)
    loss = dice_loss(pred, labels, num_classes=4, gt_values=(0, 1, 2, 3))
    jax.block_until_ready(loss)
    assert loss.shape == ()

    print("KERNEL_OK")
</pallas_src>

<mosaic_0001>
module attributes {stable_mosaic.version = 11 : i64} {
  func.func @_dice_label_kernel(%arg0: i32, %arg1: i32, %arg2: i32, %arg3: memref<1x4x2x128xf32, #tpu.memory_space<vmem>>, %arg4: memref<1x2x128xi32, #tpu.memory_space<vmem>>, %arg5: memref<1x4x8x128xf32, #tpu.memory_space<vmem>>, %arg6: memref<1x4x8x128xf32, #tpu.memory_space<vmem>>, %arg7: memref<1x4x8x128xf32, #tpu.memory_space<vmem>>) attributes {dimension_semantics = [#tpu.dimension_semantics<parallel>, #tpu.dimension_semantics<parallel>, #tpu.dimension_semantics<arbitrary>], iteration_bounds = array<i64: 2, 1, 1>, scalar_prefetch = 0 : i64, scratch_operands = 0 : i64, tpu.core_type = #tpu.core_type<tc>, window_params = [{transform_indices = @transform_0, window_bounds = array<i64: 1, 4, 2, 128>}, {transform_indices = @transform_1, window_bounds = array<i64: 1, 2, 128>}, {transform_indices = @transform_2, window_bounds = array<i64: 1, 4, 8, 128>}, {transform_indices = @transform_3, window_bounds = array<i64: 1, 4, 8, 128>}, {transform_indices = @transform_4, window_bounds = array<i64: 1, 4, 8, 128>}]} {
    %c0_i32 = arith.constant 0 : i32
    %0 = arith.cmpi eq, %arg2, %c0_i32 : i32
    %1 = arith.extui %0 : i1 to i32
    %c0_i32_0 = arith.constant 0 : i32
    %2 = arith.cmpi ne, %1, %c0_i32_0 : i32
    scf.if %2 {
      %cst_116 = arith.constant 0.000000e+00 : f32
      %113 = vector.broadcast %cst_116 : f32 to vector<1x4x8x128xf32>
      %c0_117 = arith.constant 0 : index
      %c0_118 = arith.constant 0 : index
      %c0_119 = arith.constant 0 : index
      %c0_120 = arith.constant 0 : index
      %114 = vector.load %arg5[%c0_117, %c0_118, %c0_119, %c0_120] : memref<1x4x8x128xf32, #tpu.memory_space<vmem>>, vector<1x4x8x128xf32>
      tpu.vector_store %arg5[%c0_117, %c0_118, %c0_119, %c0_120], %113 {strides = array<i32>} : memref<1x4x8x128xf32, #tpu.memory_space<vmem>>, vector<1x4x8x128xf32>,
      %cst_121 = arith.constant 0.000000e+00 : f32
      %115 = vector.broadcast %cst_121 : f32 to vector<1x4x8x128xf32>
      %c0_122 = arith.constant 0 : index
      %c0_123 = arith.constant 0 : index
      %c0_124 = arith.constant 0 : index
      %c0_125 = arith.constant 0 : index
      %116 = vector.load %arg6[%c0_122, %c0_123, %c0_124, %c0_125] : memref<1x4x8x128xf32, #tpu.memory_space<vmem>>, vector<1x4x8x128xf32>
      tpu.vector_store %arg6[%c0_122, %c0_123, %c0_124, %c0_125], %115 {strides = array<i32>} : memref<1x4x8x128xf32, #tpu.memory_space<vmem>>, vector<1x4x8x128xf32>,
      %cst_126 = arith.constant 0.000000e+00 : f32
      %117 = vector.broadcast %cst_126 : f32 to vector<1x4x8x128xf32>
      %c0_127 = arith.constant 0 : index
      %c0_128 = arith.constant 0 : index
      %c0_129 = arith.constant 0 : index
      %c0_130 = arith.constant 0 : index
      %118 = vector.load %arg7[%c0_127, %c0_128, %c0_129, %c0_130] : memref<1x4x8x128xf32, #tpu.memory_space<vmem>>, vector<1x4x8x128xf32>
      tpu.vector_store %arg7[%c0_127, %c0_128, %c0_129, %c0_130], %117 {strides = array<i32>} : memref<1x4x8x128xf32, #tpu.memory_space<vmem>>, vector<1x4x8x128xf32>,
    } else {
    }
    %c0 = arith.constant 0 : index
    %c0_1 = arith.constant 0 : index
    %c0_2 = arith.constant 0 : index
    %3 = vector.load %arg4[%c0, %c0_1, %c0_2] : memref<1x2x128xi32, #tpu.memory_space<vmem>>, vector<1x2x128xi32>
    %4 = vector.shape_cast %3 : vector<1x2x128xi32> to vector<2x128xi32>
    %c0_3 = arith.constant 0 : index
    %c0_4 = arith.constant 0 : index
    %c0_5 = arith.constant 0 : index
    %c0_6 = arith.constant 0 : index
    %5 = vector.load %arg3[%c0_3, %c0_4, %c0_5, %c0_6] : memref<1x4x2x128xf32, #tpu.memory_space<vmem>>, vector<1x1x2x128xf32>
    %6 = vector.shape_cast %5 : vector<1x1x2x128xf32> to vector<2x128xf32>
    %c0_i32_7 = arith.constant 0 : i32
    %7 = vector.broadcast %c0_i32_7 : i32 to vector<2x128xi32>
    %8 = arith.cmpi eq, %4, %7 : vector<2x128xi32>
    %9 = arith.extui %8 : vector<2x128xi1> to vector<2x128xi32>
    %10 = arith.sitofp %9 : vector<2x128xi32> to vector<2x128xf32>
    %cst = arith.constant 0.000000e+00 : f32
    %11 = vector.broadcast %cst : f32 to vector<2x128xf32>
    %12 = arith.select %8, %6, %11 : vector<2x128xi1>, vector<2x128xf32>
    %c0_8 = arith.constant 0 : index
    %c0_9 = arith.constant 0 : index
    %c0_10 = arith.constant 0 : index
    %c0_11 = arith.constant 0 : index
    %13 = vector.load %arg5[%c0_8, %c0_9, %c0_10, %c0_11] : memref<1x4x8x128xf32, #tpu.memory_space<vmem>>, vector<1x1x2x128xf32>
    %14 = vector.shape_cast %13 : vector<1x1x2x128xf32> to vector<2x128xf32>
    %15 = arith.addf %14, %12 : vector<2x128xf32>
    %c0_12 = arith.constant 0 : index
    %c0_13 = arith.constant 0 : index
    %c0_14 = arith.constant 0 : index
    %c0_15 = arith.constant 0 : index
    %16 = vector.load %arg5[%c0_12, %c0_13, %c0_14, %c0_15] : memref<1x4x8x128xf32, #tpu.memory_space<vmem>>, vector<1x1x2x128xf32>
    %17 = vector.shape_cast %16 : vector<1x1x2x128xf32> to vector<2x128xf32>
    %18 = vector.shape_cast %15 : vector<2x128xf32> to vector<1x1x2x128xf32>
    tpu.vector_store %arg5[%c0_12, %c0_13, %c0_14, %c0_15], %18 {strides = array<i32>} : memref<1x4x8x128xf32, #tpu.memory_space<vmem>>, vector<1x1x2x128xf32>,
    %19 = arith.mulf %6, %6 : vector<2x128xf32>
    %c0_16 = arith.constant 0 : index
    %c0_17 = arith.constant 0 : index
    %c0_18 = arith.constant 0 : index
    %c0_19 = arith.constant 0 : index
    %20 = vector.load %arg6[%c0_16, %c0_17, %c0_18, %c0_19] : memref<1x4x8x128xf32, #tpu.memory_space<vmem>>, vector<1x1x2x128xf32>
    %21 = vector.shape_cast %20 : vector<1x1x2x128xf32> to vector<2x128xf32>
    %22 = arith.addf %21, %19 : vector<2x128xf32>
    %c0_20 = arith.constant 0 : index
    %c0_21 = arith.constant 0 : index
    %c0_22 = arith.constant 0 : index
    %c0_23 = arith.constant 0 : index
    %23 = vector.load %arg6[%c0_20, %c0_21, %c0_22, %c0_23] : memref<1x4x8x128xf32, #tpu.memory_space<vmem>>, vector<1x1x2x128xf32>
    %24 = vector.shape_cast %23 : vector<1x1x2x128xf32> to vector<2x128xf32>
    %25 = vector.shape_cast %22 : vector<2x128xf32> to vector<1x1x2x128xf32>
    tpu.vector_store %arg6[%c0_20, %c0_21, %c0_22, %c0_23], %25 {strides = array<i32>} : memref<1x4x8x128xf32, #tpu.memory_space<vmem>>, vector<1x1x2x128xf32>,
    %c0_24 = arith.constant 0 : index
    %c0_25 = arith.constant 0 : index
    %c0_26 = arith.constant 0 : index
    %c0_27 = arith.constant 0 : index
    %26 = vector.load %arg7[%c0_24, %c0_25, %c0_26, %c0_27] : memref<1x4x8x128xf32, #tpu.memory_space<vmem>>, vector<1x1x2x128xf32>
    %27 = vector.shape_cast %26 : vector<1x1x2x128xf32> to vector<2x128xf32>
    %28 = arith.addf %27, %10 : vector<2x128xf32>
    %c0_28 = arith.constant 0 : index
    %c0_29 = arith.constant 0 : index
    %c0_30 = arith.constant 0 : index
    %c0_31 = arith.constant 0 : index
    %29 = vector.load %arg7[%c0_28, %c0_29, %c0_30, %c0_31] : memref<1x4x8x128xf32, #tpu.memory_space<vmem>>, vector<1x1x2x128xf32>
    %30 = vector.shape_cast %29 : vector<1x1x2x128xf32> to vector<2x128xf32>
    %31 = vector.shape_cast %28 : vector<2x128xf32> to vector<1x1x2x128xf32>
    tpu.vector_store %arg7[%c0_28, %c0_29, %c0_30, %c0_31], %31 {strides = array<i32>} : memref<1x4x8x128xf32, #tpu.memory_space<vmem>>, vector<1x1x2x128xf32>,
    %c0_32 = arith.constant 0 : index
    %c1 = arith.constant 1 : index
    %c0_33 = arith.constant 0 : index
    %c0_34 = arith.constant 0 : index
    %32 = vector.load %arg3[%c0_32, %c1, %c0_33, %c0_34] : memref<1x4x2x128xf32, #tpu.memory_space<vmem>>, vector<1x1x2x128xf32>
    %33 = vector.shape_cast %32 : vector<1x1x2x128xf32> to vector<2x128xf32>
    %c1_i32 = arith.constant 1 : i32
    %34 = vector.broadcast %c1_i32 : i32 to vector<2x128xi32>
    %35 = arith.cmpi eq, %4, %34 : vector<2x128xi32>
    %36 = arith.extui %35 : vector<2x128xi1> to vector<2x128xi32>
    %37 = arith.sitofp %36 : vector<2x128xi32> to vector<2x128xf32>
    %cst_35 = arith.constant 0.000000e+00 : f32
    %38 = vector.broadcast %cst_35 : f32 to vector<2x128xf32>
    %39 = arith.select %35, %33, %38 : vector<2x128xi1>, vector<2x128xf32>
    %c0_36 = arith.constant 0 : index
    %c1_37 = arith.constant 1 : index
    %c0_38 = arith.constant 0 : index
    %c0_39 = arith.constant 0 : index
    %40 = vector.load %arg5[%c0_36, %c1_37, %c0_38, %c0_39] : memref<1x4x8x128xf32, #tpu.memory_space<vmem>>, vector<1x1x2x128xf32>
    %41 = vector.shape_cast %40 : vector<1x1x2x128xf32> to vector<2x128xf32>
    %42 = arith.addf %41, %39 : vector<2x128xf32>
    %c0_40 = arith.constant 0 : index
    %c1_41 = arith.constant 1 : index
    %c0_42 = arith.constant 0 : index
    %c0_43 = arith.constant 0 : index
    %43 = vector.load %arg5[%c0_40, %c1_41, %c0_42, %c0_43] : memref<1x4x8x128xf32, #tpu.memory_space<vmem>>, vector<1x1x2x128xf32>
    %44 = vector.shape_cast %43 : vector<1x1x2x128xf32> to vector<2x128xf32>
    %45 = vector.shape_cast %42 : vector<2x128xf32> to vector<1x1x2x128xf32>
    tpu.vector_store %arg5[%c0_40, %c1_41, %c0_42, %c0_43], %45 {strides = array<i32>} : memref<1x4x8x128xf32, #tpu.memory_space<vmem>>, vector<1x1x2x128xf32>,
    %46 = arith.mulf %33, %33 : vector<2x128xf32>
    %c0_44 = arith.constant 0 : index
    %c1_45 = arith.constant 1 : index
    %c0_46 = arith.constant 0 : index
    %c0_47 = arith.constant 0 : index
    %47 = vector.load %arg6[%c0_44, %c1_45, %c0_46, %c0_47] : memref<1x4x8x128xf32, #tpu.memory_space<vmem>>, vector<1x1x2x128xf32>
    %48 = vector.shape_cast %47 : vector<1x1x2x128xf32> to vector<2x128xf32>
    %49 = arith.addf %48, %46 : vector<2x128xf32>
    %c0_48 = arith.constant 0 : index
    %c1_49 = arith.constant 1 : index
    %c0_50 = arith.constant 0 : index
    %c0_51 = arith.constant 0 : index
    %50 = vector.load %arg6[%c0_48, %c1_49, %c0_50, %c0_51] : memref<1x4x8x128xf32, #tpu.memory_space<vmem>>, vector<1x1x2x128xf32>
    %51 = vector.shape_cast %50 : vector<1x1x2x128xf32> to vector<2x128xf32>
    %52 = vector.shape_cast %49 : vector<2x128xf32> to vector<1x1x2x128xf32>
    tpu.vector_store %arg6[%c0_48, %c1_49, %c0_50, %c0_51], %52 {strides = array<i32>} : memref<1x4x8x128xf32, #tpu.memory_space<vmem>>, vector<1x1x2x128xf32>,
    %c0_52 = arith.constant 0 : index
    %c1_53 = arith.constant 1 : index
    %c0_54 = arith.constant 0 : index
    %c0_55 = arith.constant 0 : index
    %53 = vector.load %arg7[%c0_52, %c1_53, %c0_54, %c0_55] : memref<1x4x8x128xf32, #tpu.memory_space<vmem>>, vector<1x1x2x128xf32>
    %54 = vector.shape_cast %53 : vector<1x1x2x128xf32> to vector<2x128xf32>
    %55 = arith.addf %54, %37 : vector<2x128xf32>
    %c0_56 = arith.constant 0 : index
    %c1_57 = arith.constant 1 : index
    %c0_58 = arith.constant 0 : index
    %c0_59 = arith.constant 0 : index
    %56 = vector.load %arg7[%c0_56, %c1_57, %c0_58, %c0_59] : memref<1x4x8x128xf32, #tpu.memory_space<vmem>>, vector<1x1x2x128xf32>
    %57 = vector.shape_cast %56 : vector<1x1x2x128xf32> to vector<2x128xf32>
    %58 = vector.shape_cast %55 : vector<2x128xf32> to vector<1x1x2x128xf32>
    tpu.vector_store %arg7[%c0_56, %c1_57, %c0_58, %c0_59], %58 {strides = array<i32>} : memref<1x4x8x128xf32, #tpu.memory_space<vmem>>, vector<1x1x2x128xf32>,
    %c0_60 = arith.constant 0 : index
    %c2 = arith.constant 2 : index
    %c0_61 = arith.constant 0 : index
    %c0_62 = arith.constant 0 : index
    %59 = vector.load %arg3[%c0_60, %c2, %c0_61, %c0_62] : memref<1x4x2x128xf32, #tpu.memory_space<vmem>>, vector<1x1x2x128xf32>
    %60 = vector.shape_cast %59 : vector<1x1x2x128xf32> to vector<2x128xf32>
    %c2_i32 = arith.constant 2 : i32
    %61 = vector.broadcast %c2_i32 : i32 to vector<2x128xi32>
    %62 = arith.cmpi eq, %4, %61 : vector<2x128xi32>
    %63 = arith.extui %62 : vector<2x128xi1> to vector<2x128xi32>
    %64 = arith.sitofp %63 : vector<2x128xi32> to vector<2x128xf32>
    %cst_63 = arith.constant 0.000000e+00 : f32
    %65 = vector.broadcast %cst_63 : f32 to vector<2x128xf32>
    %66 = arith.select %62, %60, %65 : vector<2x128xi1>, vector<2x128xf32>
    %c0_64 = arith.constant 0 : index
    %c2_65 = arith.constant 2 : index
    %c0_66 = arith.constant 0 : index
    %c0_67 = arith.constant 0 : index
    %67 = vector.load %arg5[%c0_64, %c2_65, %c0_66, %c0_67] : memref<1x4x8x128xf32, #tpu.memory_space<vmem>>, vector<1x1x2x128xf32>
    %68 = vector.shape_cast %67 : vector<1x1x2x128xf32> to vector<2x128xf32>
    %69 = arith.addf %68, %66 : vector<2x128xf32>
    %c0_68 = arith.constant 0 : index
    %c2_69 = arith.constant 2 : index
    %c0_70 = arith.constant 0 : index
    %c0_71 = arith.constant 0 : index
    %70 = vector.load %arg5[%c0_68, %c2_69, %c0_70, %c0_71] : memref<1x4x8x128xf32, #tpu.memory_space<vmem>>, vector<1x1x2x128xf32>
    %71 = vector.shape_cast %70 : vector<1x1x2x128xf32> to vector<2x128xf32>
    %72 = vector.shape_cast %69 : vector<2x128xf32> to vector<1x1x2x128xf32>
    tpu.vector_store %arg5[%c0_68, %c2_69, %c0_70, %c0_71], %72 {strides = array<i32>} : memref<1x4x8x128xf32, #tpu.memory_space<vmem>>, vector<1x1x2x128xf32>,
    %73 = arith.mulf %60, %60 : vector<2x128xf32>
    %c0_72 = arith.constant 0 : index
    %c2_73 = arith.constant 2 : index
    %c0_74 = arith.constant 0 : index
    %c0_75 = arith.constant 0 : index
    %74 = vector.load %arg6[%c0_72, %c2_73, %c0_74, %c0_75] : memref<1x4x8x128xf32, #tpu.memory_space<vmem>>, vector<1x1x2x128xf32>
    %75 = vector.shape_cast %74 : vector<1x1x2x128xf32> to vector<2x128xf32>
    %76 = arith.addf %75, %73 : vector<2x128xf32>
    %c0_76 = arith.constant 0 : index
    %c2_77 = arith.constant 2 : index
    %c0_78 = arith.constant 0 : index
    %c0_79 = arith.constant 0 : index
    %77 = vector.load %arg6[%c0_76, %c2_77, %c0_78, %c0_79] : memref<1x4x8x128xf32, #tpu.memory_space<vmem>>, vector<1x1x2x128xf32>
    %78 = vector.shape_cast %77 : vector<1x1x2x128xf32> to vector<2x128xf32>
    %79 = vector.shape_cast %76 : vector<2x128xf32> to vector<1x1x2x128xf32>
    tpu.vector_store %arg6[%c0_76, %c2_77, %c0_78, %c0_79], %79 {strides = array<i32>} : memref<1x4x8x128xf32, #tpu.memory_space<vmem>>, vector<1x1x2x128xf32>,
    %c0_80 = arith.constant 0 : index
    %c2_81 = arith.constant 2 : index
    %c0_82 = arith.constant 0 : index
    %c0_83 = arith.constant 0 : index
    %80 = vector.load %arg7[%c0_80, %c2_81, %c0_82, %c0_83] : memref<1x4x8x128xf32, #tpu.memory_space<vmem>>, vector<1x1x2x128xf32>
    %81 = vector.shape_cast %80 : vector<1x1x2x128xf32> to vector<2x128xf32>
    %82 = arith.addf %81, %64 : vector<2x128xf32>
    %c0_84 = arith.constant 0 : index
    %c2_85 = arith.constant 2 : index
    %c0_86 = arith.constant 0 : index
    %c0_87 = arith.constant 0 : index
    %83 = vector.load %arg7[%c0_84, %c2_85, %c0_86, %c0_87] : memref<1x4x8x128xf32, #tpu.memory_space<vmem>>, vector<1x1x2x128xf32>
    %84 = vector.shape_cast %83 : vector<1x1x2x128xf32> to vector<2x128xf32>
    %85 = vector.shape_cast %82 : vector<2x128xf32> to vector<1x1x2x128xf32>
    tpu.vector_store %arg7[%c0_84, %c2_85, %c0_86, %c0_87], %85 {strides = array<i32>} : memref<1x4x8x128xf32, #tpu.memory_space<vmem>>, vector<1x1x2x128xf32>,
    %c0_88 = arith.constant 0 : index
    %c3 = arith.constant 3 : index
    %c0_89 = arith.constant 0 : index
    %c0_90 = arith.constant 0 : index
    %86 = vector.load %arg3[%c0_88, %c3, %c0_89, %c0_90] : memref<1x4x2x128xf32, #tpu.memory_space<vmem>>, vector<1x1x2x128xf32>
    %87 = vector.shape_cast %86 : vector<1x1x2x128xf32> to vector<2x128xf32>
    %c3_i32 = arith.constant 3 : i32
    %88 = vector.broadcast %c3_i32 : i32 to vector<2x128xi32>
    %89 = arith.cmpi eq, %4, %88 : vector<2x128xi32>
    %90 = arith.extui %89 : vector<2x128xi1> to vector<2x128xi32>
    %91 = arith.sitofp %90 : vector<2x128xi32> to vector<2x128xf32>
    %cst_91 = arith.constant 0.000000e+00 : f32
    %92 = vector.broadcast %cst_91 : f32 to vector<2x128xf32>
    %93 = arith.select %89, %87, %92 : vector<2x128xi1>, vector<2x128xf32>
    %c0_92 = arith.constant 0 : index
    %c3_93 = arith.constant 3 : index
    %c0_94 = arith.constant 0 : index
    %c0_95 = arith.constant 0 : index
    %94 = vector.load %arg5[%c0_92, %c3_93, %c0_94, %c0_95] : memref<1x4x8x128xf32, #tpu.memory_space<vmem>>, vector<1x1x2x128xf32>
    %95 = vector.shape_cast %94 : vector<1x1x2x128xf32> to vector<2x128xf32>
    %96 = arith.addf %95, %93 : vector<2x128xf32>
    %c0_96 = arith.constant 0 : index
    %c3_97 = arith.constant 3 : index
    %c0_98 = arith.constant 0 : index
    %c0_99 = arith.constant 0 : index
    %97 = vector.load %arg5[%c0_96, %c3_97, %c0_98, %c0_99] : memref<1x4x8x128xf32, #tpu.memory_space<vmem>>, vector<1x1x2x128xf32>
    %98 = vector.shape_cast %97 : vector<1x1x2x128xf32> to vector<2x128xf32>
    %99 = vector.shape_cast %96 : vector<2x128xf32> to vector<1x1x2x128xf32>
    tpu.vector_store %arg5[%c0_96, %c3_97, %c0_98, %c0_99], %99 {strides = array<i32>} : memref<1x4x8x128xf32, #tpu.memory_space<vmem>>, vector<1x1x2x128xf32>,
    %100 = arith.mulf %87, %87 : vector<2x128xf32>
    %c0_100 = arith.constant 0 : index
    %c3_101 = arith.constant 3 : index
    %c0_102 = arith.constant 0 : index
    %c0_103 = arith.constant 0 : index
    %101 = vector.load %arg6[%c0_100, %c3_101, %c0_102, %c0_103] : memref<1x4x8x128xf32, #tpu.memory_space<vmem>>, vector<1x1x2x128xf32>
    %102 = vector.shape_cast %101 : vector<1x1x2x128xf32> to vector<2x128xf32>
    %103 = arith.addf %102, %100 : vector<2x128xf32>
    %c0_104 = arith.constant 0 : index
    %c3_105 = arith.constant 3 : index
    %c0_106 = arith.constant 0 : index
    %c0_107 = arith.constant 0 : index
    %104 = vector.load %arg6[%c0_104, %c3_105, %c0_106, %c0_107] : memref<1x4x8x128xf32, #tpu.memory_space<vmem>>, vector<1x1x2x128xf32>
    %105 = vector.shape_cast %104 : vector<1x1x2x128xf32> to vector<2x128xf32>
    %106 = vector.shape_cast %103 : vector<2x128xf32> to vector<1x1x2x128xf32>
    tpu.vector_store %arg6[%c0_104, %c3_105, %c0_106, %c0_107], %106 {strides = array<i32>} : memref<1x4x8x128xf32, #tpu.memory_space<vmem>>, vector<1x1x2x128xf32>,
    %c0_108 = arith.constant 0 : index
    %c3_109 = arith.constant 3 : index
    %c0_110 = arith.constant 0 : index
    %c0_111 = arith.constant 0 : index
    %107 = vector.load %arg7[%c0_108, %c3_109, %c0_110, %c0_111] : memref<1x4x8x128xf32, #tpu.memory_space<vmem>>, vector<1x1x2x128xf32>
    %108 = vector.shape_cast %107 : vector<1x1x2x128xf32> to vector<2x128xf32>
    %109 = arith.addf %108, %91 : vector<2x128xf32>
    %c0_112 = arith.constant 0 : index
    %c3_113 = arith.constant 3 : index
    %c0_114 = arith.constant 0 : index
    %c0_115 = arith.constant 0 : index
    %110 = vector.load %arg7[%c0_112, %c3_113, %c0_114, %c0_115] : memref<1x4x8x128xf32, #tpu.memory_space<vmem>>, vector<1x1x2x128xf32>
    %111 = vector.shape_cast %110 : vector<1x1x2x128xf32> to vector<2x128xf32>
    %112 = vector.shape_cast %109 : vector<2x128xf32> to vector<1x1x2x128xf32>
    tpu.vector_store %arg7[%c0_112, %c3_113, %c0_114, %c0_115], %112 {strides = array<i32>} : memref<1x4x8x128xf32, #tpu.memory_space<vmem>>, vector<1x1x2x128xf32>,
    return
  }
  func.func @transform_0(%arg0: i32, %arg1: i32, %arg2: i32) -> (i32, i32, i32, i32) {
    %c1_i32 = arith.constant 1 : i32
    %0 = arith.muli %arg1, %c1_i32 : i32
    %1 = arith.addi %0, %arg2 : i32
    %c0_i32 = arith.constant 0 : i32
    %2 = arith.minsi %1, %c0_i32 : i32
    %c0_i32_0 = arith.constant 0 : i32
    %c0_i32_1 = arith.constant 0 : i32
    %c0_i32_2 = arith.constant 0 : i32
    return %arg0, %c0_i32_0, %2, %c0_i32_1 : i32, i32, i32, i32
  }
  func.func @transform_1(%arg0: i32, %arg1: i32, %arg2: i32) -> (i32, i32, i32) {
    %c1_i32 = arith.constant 1 : i32
    %0 = arith.muli %arg1, %c1_i32 : i32
    %1 = arith.addi %0, %arg2 : i32
    %c0_i32 = arith.constant 0 : i32
    %2 = arith.minsi %1, %c0_i32 : i32
    %c0_i32_0 = arith.constant 0 : i32
    %c0_i32_1 = arith.constant 0 : i32
    return %arg0, %2, %c0_i32_0 : i32, i32, i32
  }
  func.func @transform_2(%arg0: i32, %arg1: i32, %arg2: i32) -> (i32, i32, i32, i32) {
    %c1_i32 = arith.constant 1 : i32
    %0 = arith.muli %arg0, %c1_i32 : i32
    %1 = arith.addi %0, %arg1 : i32
    %c0_i32 = arith.constant 0 : i32
    %c0_i32_0 = arith.constant 0 : i32
    %c0_i32_1 = arith.constant 0 : i32
    %c0_i32_2 = arith.constant 0 : i32
    return %1, %c0_i32, %c0_i32_0, %c0_i32_1 : i32, i32, i32, i32
  }
  func.func @transform_3(%arg0: i32, %arg1: i32, %arg2: i32) -> (i32, i32, i32, i32) {
    %c1_i32 = arith.constant 1 : i32
    %0 = arith.muli %arg0, %c1_i32 : i32
    %1 = arith.addi %0, %arg1 : i32
    %c0_i32 = arith.constant 0 : i32
    %c0_i32_0 = arith.constant 0 : i32
    %c0_i32_1 = arith.constant 0 : i32
    %c0_i32_2 = arith.constant 0 : i32
    return %1, %c0_i32, %c0_i32_0, %c0_i32_1 : i32, i32, i32, i32
  }
  func.func @transform_4(%arg0: i32, %arg1: i32, %arg2: i32) -> (i32, i32, i32, i32) {
    %c1_i32 = arith.constant 1 : i32
    %0 = arith.muli %arg0, %c1_i32 : i32
    %1 = arith.addi %0, %arg1 : i32
    %c0_i32 = arith.constant 0 : i32
    %c0_i32_0 = arith.constant 0 : i32
    %c0_i32_1 = arith.constant 0 : i32
    %c0_i32_2 = arith.constant 0 : i32
    return %1, %c0_i32, %c0_i32_0, %c0_i32_1 : i32, i32, i32, i32
  }
}

</mosaic_0001>

<llo_original>
// kernel: dice_loss.1
$region0: #{dice_loss.1}
  #allocation0 [shape = 'u32[]', space=smem, size = 0x4, offset = 0x4, fixed_abs, tag = 'smem constant byte address 0x4 - core index']
  #allocation1 [shape = 'u32[144,128]{1,0:T(1,128)}', space=vmem, size = 0x12000, scoped, tag = 'internal scratch']
  %s0 = inlined_call_operand.vmem [shape: f32[2,4,2,128], index: 0, kind: input, shape index: {}]
  %s1 = inlined_call_operand.vmem [shape: s32[2,2,128], index: 1, kind: input, shape index: {}]
  %s2 = inlined_call_operand.vmem [shape: f32[2,4,8,128], index: 2, kind: output, shape index: {0}]
  %s3 = inlined_call_operand.vmem [shape: f32[2,4,8,128], index: 3, kind: output, shape index: {1}]
  %s4 = inlined_call_operand.vmem [shape: f32[2,4,8,128], index: 4, kind: output, shape index: {2}]
  %5 = xla_tuple %s2, %s3, %s4
  %s6 = sld [smem:[#allocation0]]
  $region61: #{dice_loss.1} parent=0
    _
  %s8 = ssub.s32 1, %s6
  %s9 = scalar_select 0, %s8, %s6
  loop: start=0, step=1, limit=4
  $region2: #{dice_loss.1} parent=0 // loop_pre_header
    _
  $region3: #{dice_loss.1} parent=0 // loop_header
    %s11 = sphi 0, %s15
    %p12 = scmp.ge.s32.totalorder %s11, 4
    %s18 = sphi 0, %s37
    %s19 = sphi 0, %s33
    %s20 = sphi 0, %s29
    %s21 = sphi 0, %s18
    %s22 = sphi 0, %s19
    %s23 = sphi 0, %s20
    %s24 = sphi 0, %s21
    %s25 = sphi 0, %s22
    %s26 = sphi 0, %s23
    %s48 = sphi 0, %s50
    %s51 = sphi 0, %s48
    %s52 = sphi 0, %s51
    %s68 = sphi 0, %s52
    %s82 = sphi 0, %s84
    %s85 = sphi 0, %s82
    %s86 = sphi 0, %s85
    %s102 = sphi 0, %s86
    %s110 = sphi 0, %s112
    %s113 = sphi 0, %s110
    %s114 = sphi 0, %s113
    %s130 = sphi 0, %s114
    %s138 = sphi 0, %s140
    %s141 = sphi 0, %s138
    %s142 = sphi 0, %s141
    %s158 = sphi 0, %s142
    %s166 = sphi 0, %s168
    %s169 = sphi 0, %s166
    %s170 = sphi 0, %s169
    %s186 = sphi 0, %s170
  $region4: #{dice_loss.1} parent=0 // loop_header_branch
    %14 = sbr.rel (%p12) target = $region8
  $region5: #{dice_loss.1} parent=0 // loop_body
    %s16 = ssub.s32 %s11, 1
    %s17 = ssub.s32 %s11, 2
    %s27 = sadd.s32 1, %s20
    %p28 = scmp.ge.s32.totalorder %s27, 1
    %s29 = scalar_select %p28, 0, %s27
    %s30 = sadd.s32 1, %s19
    %s31 = scalar_select %p28, %s30, %s19
    %p32 = scmp.ge.s32.totalorder %s31, 1
    %s33 = scalar_select %p32, 0, %s31
    %s34 = sadd.s32 1, %s18
    %s35 = scalar_select %p32, %s34, %s18
    %p36 = scmp.ge.s32.totalorder %s35, 2
    %s37 = scalar_select %p36, 0, %s35
    %s38 = sadd.s32 %s19, %s20
    %p39 = scmp.lt.s32.totalorder %s38, 0
    %s40 = scalar_select %p39, %s38, 0
    %s41 = sadd.s32 %s33, %s29
    %p42 = scmp.lt.s32.totalorder %s41, 0
    %s43 = scalar_select %p42, %s41, 0
    %s44 = ssub.s32 %s18, %s37
    %s45 = ssub.s32 %s40, %s43
    %s46 = sor.u32 %s44, %s45
    %p47 = scmp.eq.s32.totalorder %s46, 0
    %s49 = sadd.s32 %s48, 1
    %s50 = scalar_select %p47, %s48, %s49
    %p53 = pneg %p47
    %p54 = scmp.eq.s32.totalorder %s11, 1
    %p55 = por %p53, %p54
    %p56 = scmp.ne.s32.totalorder %s48, %s51
    %p57 = scmp.eq.s32.totalorder %s11, 0
    %p58 = por %p56, %p57
    %p59 = scmp.ne.s32.totalorder %s48, %s51
    %p60 = scmp.eq.s32.totalorder %s16, 1
    %p61 = por %p59, %p60
    %p62 = scmp.ne.s32.totalorder %s51, %s52
    %p63 = scmp.eq.s32.totalorder %s16, 0
    %p64 = por %p62, %p63
    %p65 = scmp.ne.s32.totalorder %s51, %s52
    %p66 = scmp.eq.s32.totalorder %s17, 1
    %p67 = por %p65, %p66
    %p69 = scmp.ne.s32.totalorder %s52, %s68
    %p70 = scmp.eq.s32.totalorder %s17, 0
    %p71 = por %p69, %p70
    %s72 = sadd.s32 %s19, %s20
    %p73 = scmp.lt.s32.totalorder %s72, 0
    %s74 = scalar_select %p73, %s72, 0
    %s75 = sadd.s32 %s33, %s29
    %p76 = scmp.lt.s32.totalorder %s75, 0
    %s77 = scalar_select %p76, %s75, 0
    %s78 = ssub.s32 %s18, %s37
    %s79 = ssub.s32 %s74, %s77
    %s80 = sor.u32 %s78, %s79
    %p81 = scmp.eq.s32.totalorder %s80, 0
    %s83 = sadd.s32 %s82, 1
    %s84 = scalar_select %p81, %s82, %s83
    %p87 = pneg %p81
    %p88 = scmp.eq.s32.totalorder %s11, 1
    %p89 = por %p87, %p88
    %p90 = scmp.ne.s32.totalorder %s82, %s85
    %p91 = scmp.eq.s32.totalorder %s11, 0
    %p92 = por %p90, %p91
    %p93 = scmp.ne.s32.totalorder %s82, %s85
    %p94 = scmp.eq.s32.totalorder %s16, 1
    %p95 = por %p93, %p94
    %p96 = scmp.ne.s32.totalorder %s85, %s86
    %p97 = scmp.eq.s32.totalorder %s16, 0
    %p98 = por %p96, %p97
    %p99 = scmp.ne.s32.totalorder %s85, %s86
    %p100 = scmp.eq.s32.totalorder %s17, 1
    %p101 = por %p99, %p100
    %p103 = scmp.ne.s32.totalorder %s86, %s102
    %p104 = scmp.eq.s32.totalorder %s17, 0
    %p105 = por %p103, %p104
    %s106 = sadd.s32 %s18, %s19
    %s107 = sadd.s32 %s37, %s33
    %s108 = ssub.s32 %s106, %s107
    %p109 = scmp.eq.s32.totalorder %s108, 0
    %s111 = sadd.s32 %s110, 1
    %s112 = scalar_select %p109, %s110, %s111
    %p115 = pneg %p109
    %p116 = scmp.eq.s32.totalorder %s11, 1
    %p117 = por %p115, %p116
    %p118 = scmp.ne.s32.totalorder %s110, %s113
    %p119 = scmp.eq.s32.totalorder %s11, 0
    %p120 = por %p118, %p119
    %p121 = scmp.ne.s32.totalorder %s110, %s113
    %p122 = scmp.eq.s32.totalorder %s16, 1
    %p123 = por %p121, %p122
    %p124 = scmp.ne.s32.totalorder %s113, %s114
    %p125 = scmp.eq.s32.totalorder %s16, 0
    %p126 = por %p124, %p125
    %p127 = scmp.ne.s32.totalorder %s113, %s114
    %p128 = scmp.eq.s32.totalorder %s17, 1
    %p129 = por %p127, %p128
    %p131 = scmp.ne.s32.totalorder %s114, %s130
    %p132 = scmp.eq.s32.totalorder %s17, 0
    %p133 = por %p131, %p132
    %s134 = sadd.s32 %s18, %s19
    %s135 = sadd.s32 %s37, %s33
    %s136 = ssub.s32 %s134, %s135
    %p137 = scmp.eq.s32.totalorder %s136, 0
    %s139 = sadd.s32 %s138, 1
    %s140 = scalar_select %p137, %s138, %s139
    %p143 = pneg %p137
    %p144 = scmp.eq.s32.totalorder %s11, 1
    %p145 = por %p143, %p144
    %p146 = scmp.ne.s32.totalorder %s138, %s141
    %p147 = scmp.eq.s32.totalorder %s11, 0
    %p148 = por %p146, %p147
    %p149 = scmp.ne.s32.totalorder %s138, %s141
    %p150 = scmp.eq.s32.totalorder %s16, 1
    %p151 = por %p149, %p150
    %p152 = scmp.ne.s32.totalorder %s141, %s142
    %p153 = scmp.eq.s32.totalorder %s16, 0
    %p154 = por %p152, %p153
    %p155 = scmp.ne.s32.totalorder %s141, %s142
    %p156 = scmp.eq.s32.totalorder %s17, 1
    %p157 = por %p155, %p156
    %p159 = scmp.ne.s32.totalorder %s142, %s158
    %p160 = scmp.eq.s32.totalorder %s17, 0
    %p161 = por %p159, %p160
    %s162 = sadd.s32 %s18, %s19
    %s163 = sadd.s32 %s37, %s33
    %s164 = ssub.s32 %s162, %s163
    %p165 = scmp.eq.s32.totalorder %s164, 0
    %s167 = sadd.s32 %s166, 1
    %s168 = scalar_select %p165, %s166, %s167
    %p171 = pneg %p165
    %p172 = scmp.eq.s32.totalorder %s11, 1
    %p173 = por %p171, %p172
    %p174 = scmp.ne.s32.totalorder %s166, %s169
    %p175 = scmp.eq.s32.totalorder %s11, 0
    %p176 = por %p174, %p175
    %p177 = scmp.ne.s32.totalorder %s166, %s169
    %p178 = scmp.eq.s32.totalorder %s16, 1
    %p179 = por %p177, %p178
    %p180 = scmp.ne.s32.totalorder %s169, %s170
    %p181 = scmp.eq.s32.totalorder %s16, 0
    %p182 = por %p180, %p181
    %p183 = scmp.ne.s32.totalorder %s169, %s170
    %p184 = scmp.eq.s32.totalorder %s17, 1
    %p185 = por %p183, %p184
    %p187 = scmp.ne.s32.totalorder %s170, %s186
    %p188 = scmp.eq.s32.totalorder %s17, 0
    %p189 = por %p187, %p188
    %p190 = scmp.le.s32.totalorder 1, %s11
    %p191 = scmp.lt.s32.totalorder %s11, 3
    %p192 = pnand %p190, %p191
    %p193 = pneg %p192
    // Predicated region
    $region9: #{dice_loss.1} parent=5 // pred_check
      _
    $region10: #{dice_loss.1} parent=5 // pred_check_branch
      %195 = sbr.rel (%p192) target = $region12
    $region11: #{dice_loss.1} parent=5 // pred_region
      %s196 = ssub.s32 %s11, 1
    $region12: #{dice_loss.1} parent=5 // pred_fallthru
      _
    %p197 = scmp.lt.s32.totalorder %s11, 2
    // Predicated region
    $region13: #{dice_loss.1} parent=5 // pred_check
      %p198 = pneg %p197
    $region14: #{dice_loss.1} parent=5 // pred_check_branch
      %200 = sbr.rel (%p198) target = $region16
    $region15: #{dice_loss.1} parent=5 // pred_region
      // Predicated region
      $region17: #{dice_loss.1} parent=15 // pred_check
        %p201 = pneg %p58
      $region18: #{dice_loss.1} parent=15 // pred_check_branch
        %203 = sbr.rel (%p201) target = $region20
      $region19: #{dice_loss.1} parent=15 // pred_region
        %s204 = sadd.s32 %s19, %s20
        %p205 = scmp.lt.s32.totalorder %s204, 0
        %s206 = scalar_select %p205, %s204, 0
        %p207 = scmp.lt.s32.totalorder %s18, 1
        %s208 = scalar_select %p207, %s18, 1
        %p209 = scmp.lt.s32.totalorder %s206, 0
        %s210 = scalar_select %p209, %s206, 0
        %s211 = smul.addr %s208, 4
        %s212 = sadd.s32 %s210, %s211
        %s213 = smul.addr %s212, 2
        %s214 = scalar_lea.vmem %s0, %s213
        %s215 = sadd.s32 %s19, %s20
        %p216 = scmp.lt.s32.totalorder %s215, 0
        %s217 = scalar_select %p216, %s215, 0
      $region20: #{dice_loss.1} parent=15 // pred_fallthru
        _
      // Predicated region
      $region21: #{dice_loss.1} parent=15 // pred_check
        %p218 = pneg %p92
      $region22: #{dice_loss.1} parent=15 // pred_check_branch
        %220 = sbr.rel (%p218) target = $region24
      $region23: #{dice_loss.1} parent=15 // pred_region
        %s221 = sadd.s32 %s19, %s20
        %p222 = scmp.lt.s32.totalorder %s221, 0
        %s223 = scalar_select %p222, %s221, 0
        %p224 = scmp.lt.s32.totalorder %s18, 1
        %s225 = scalar_select %p224, %s18, 1
        %p226 = scmp.lt.s32.totalorder %s223, 0
        %s227 = scalar_select %p226, %s223, 0
        %s228 = sadd.s32 %s227, %s225
        %s229 = smul.addr %s228, 2
        %s230 = scalar_lea.vmem %s1, %s229
        %s231 = sadd.s32 %s19, %s20
        %p232 = scmp.lt.s32.totalorder %s231, 0
        %s233 = scalar_select %p232, %s231, 0
      $region24: #{dice_loss.1} parent=15 // pred_fallthru
        _
    $region16: #{dice_loss.1} parent=5 // pred_fallthru
      _
    %p234 = scmp.le.s32.totalorder 1, %s11
    %p235 = scmp.lt.s32.totalorder %s11, 3
    %p236 = pnand %p234, %p235
    %p237 = pneg %p236
    // Predicated region
    $region25: #{dice_loss.1} parent=5 // pred_check
      _
    $region26: #{dice_loss.1} parent=5 // pred_check_branch
      %239 = sbr.rel (%p236) target = $region28
    $region27: #{dice_loss.1} parent=5 // pred_region
      %s240 = ssub.s32 %s11, 1
      %s241 = sadd.s32 %s22, %s23
      %p242 = scmp.lt.s32.totalorder %s241, 0
      %s243 = scalar_select %p242, %s241, 0
      %p244 = scmp.lt.s32.totalorder %s21, 1
      %s245 = scalar_select %p244, %s21, 1
      %p246 = scmp.lt.s32.totalorder %s243, 0
      %s247 = scalar_select %p246, %s243, 0
      %s248 = smul.addr %s245, 4
      %s249 = sadd.s32 %s247, %s248
      %s250 = smul.addr %s249, 2
      %s251 = scalar_lea.vmem %s0, %s250
      %p252 = pneg %p64
      %p253 = pneg %p61
      %s254 = sadd.s32 %s22, %s23
      %p255 = scmp.lt.s32.totalorder %s254, 0
      %s256 = scalar_select %p255, %s254, 0
      %p257 = scmp.lt.s32.totalorder %s21, 1
      %s258 = scalar_select %p257, %s21, 1
      %p259 = scmp.lt.s32.totalorder %s256, 0
      %s260 = scalar_select %p259, %s256, 0
      %s261 = sadd.s32 %s260, %s258
      %s262 = smul.addr %s261, 2
      %s263 = scalar_lea.vmem %s1, %s262
      %p264 = pneg %p98
      %p265 = pneg %p95
      %p266 = pneg %p126
      %p267 = pneg %p123
      %s268 = sadd.s32 %s21, %s22
      %p269 = scmp.lt.s32.totalorder %s268, 1
      %s270 = scalar_select %p269, %s268, 1
      %s271 = smul.addr %s270, 4
      %s272 = smul.addr %s271, 8
      %s273 = scalar_lea.vmem %s2, %s272
      %p274 = pneg %p154
      %p275 = pneg %p151
      %s276 = sadd.s32 %s21, %s22
      %p277 = scmp.lt.s32.totalorder %s276, 1
      %s278 = scalar_select %p277, %s276, 1
      %s279 = smul.addr %s278, 4
      %s280 = smul.addr %s279, 8
      %s281 = scalar_lea.vmem %s3, %s280
      %p282 = pneg %p182
      %p283 = pneg %p179
      %s284 = sadd.s32 %s21, %s22
      %p285 = scmp.lt.s32.totalorder %s284, 1
      %s286 = scalar_select %p285, %s284, 1
      %s287 = smul.addr %s286, 4
      %s288 = smul.addr %s287, 8
      %s289 = scalar_lea.vmem %s4, %s288
      %s290 = sadd.s32 %s22, %s23
      %p291 = scmp.lt.s32.totalorder %s290, 0
      %s292 = scalar_select %p291, %s290, 0
      %p293 = scmp.lt.s32.totalorder %s21, 1
      %s294 = scalar_select %p293, %s21, 1
      %p295 = scmp.lt.s32.totalorder %s292, 0
      %s296 = scalar_select %p295, %s292, 0
      %s297 = smul.addr %s294, 4
      %s298 = sadd.s32 %s296, %s297
      %s299 = smul.addr %s298, 2
      %s300 = scalar_lea.vmem %s0, %s299
      %s301 = sadd.s32 %s22, %s23
      %p302 = scmp.lt.s32.totalorder %s301, 0
      %s303 = scalar_select %p302, %s301, 0
      %s304 = sadd.s32 %s22, %s23
      %p305 = scmp.lt.s32.totalorder %s304, 0
      %s306 = scalar_select %p305, %s304, 0
      %p307 = scmp.lt.s32.totalorder %s21, 1
      %s308 = scalar_select %p307, %s21, 1
      %p309 = scmp.lt.s32.totalorder %s306, 0
      %s310 = scalar_select %p309, %s306, 0
      %s311 = sadd.s32 %s310, %s308
      %s312 = smul.addr %s311, 2
      %s313 = scalar_lea.vmem %s1, %s312
      %s314 = sadd.s32 %s22, %s23
      %p315 = scmp.lt.s32.totalorder %s314, 0
      %s316 = scalar_select %p315, %s314, 0
      %s317 = sadd.s32 %s21, %s22
      %p318 = scmp.lt.s32.totalorder %s317, 1
      %s319 = scalar_select %p318, %s317, 1
      %s320 = smul.addr %s319, 4
      %s321 = smul.addr %s320, 8
      %s322 = scalar_lea.vmem %s2, %s321
      %s323 = sadd.s32 %s21, %s22
      %s324 = sadd.s32 %s21, %s22
      %p325 = scmp.lt.s32.totalorder %s324, 1
      %s326 = scalar_select %p325, %s324, 1
      %s327 = smul.addr %s326, 4
      %s328 = smul.addr %s327, 8
      %s329 = scalar_lea.vmem %s3, %s328
      %s330 = sadd.s32 %s21, %s22
      %s331 = sadd.s32 %s21, %s22
      %p332 = scmp.lt.s32.totalorder %s331, 1
      %s333 = scalar_select %p332, %s331, 1
      %s334 = smul.addr %s333, 4
      %s335 = smul.addr %s334, 8
      %s336 = scalar_lea.vmem %s4, %s335
      %s337 = sadd.s32 %s21, %s22
      %p338 = scmp.eq.s32.totalorder %s23, 0
      // Predicated region
      $region29: #{dice_loss.1} parent=27 // pred_check
        %p339 = pneg %p338
      $region30: #{dice_loss.1} parent=27 // pred_check_branch
        %341 = sbr.rel (%p339) target = $region32
      $region31: #{dice_loss.1} parent=27 // pred_region
        %342 = vst [vmem:[%s322] sm:$0xff] 0.0
        %343 = vst [vmem:[%s322 + $0x8] sm:$0xff] 0.0
        %344 = vst [vmem:[%s322 + $0x10] sm:$0xff] 0.0
        %345 = vst [vmem:[%s322 + $0x18] sm:$0xff] 0.0
        %346 = vst [vmem:[%s329] sm:$0xff] 0.0
        %347 = vst [vmem:[%s329 + $0x8] sm:$0xff] 0.0
        %348 = vst [vmem:[%s329 + $0x10] sm:$0xff] 0.0
        %349 = vst [vmem:[%s329 + $0x18] sm:$0xff] 0.0
        %350 = vst [vmem:[%s336] sm:$0xff] 0.0
        %351 = vst [vmem:[%s336 + $0x8] sm:$0xff] 0.0
        %352 = vst [vmem:[%s336 + $0x10] sm:$0xff] 0.0
        %353 = vst [vmem:[%s336 + $0x18] sm:$0xff] 0.0
      $region32: #{dice_loss.1} parent=27 // pred_fallthru
        _
      %v354 = vld [vmem:[%s313] sm:$0x3]
      %v355 = vld [vmem:[%s300] sm:$0x3]
      %vm356 = vcmp.eq.s32.totalorder %v354, 0
      %v357 = vsel %vm356, 1, 0
      %v358 = vcvt.s32.f32 %v357
      %v359 = vsel %vm356, %v355, 0.0
      %v360 = vld [vmem:[%s322] sm:$0x3]
      %v361 = vadd.f32 %v360, %v359
      %362 = vst [vmem:[%s322] sm:$0x3] %v361
      %v363 = vmul.f32 %v355, %v355
      %v364 = vld [vmem:[%s329] sm:$0x3]
      %v365 = vadd.f32 %v364, %v363
      %366 = vst [vmem:[%s329] sm:$0x3] %v365
      %v367 = vld [vmem:[%s336] sm:$0x3]
      %v368 = vadd.f32 %v367, %v358
      %369 = vst [vmem:[%s336] sm:$0x3] %v368
      %s370 = scalar_lea.vmem %s300, 2
      %v371 = vld [vmem:[%s370] sm:$0x3]
      %vm372 = vcmp.eq.s32.totalorder %v354, 1
      %v373 = vsel %vm372, 1, 0
      %v374 = vcvt.s32.f32 %v373
      %v375 = vsel %vm372, %v371, 0.0
      %s376 = scalar_lea.vmem %s322, 8
      %v377 = vld [vmem:[%s376] sm:$0x3]
      %v378 = vadd.f32 %v377, %v375
      %379 = vst [vmem:[%s376] sm:$0x3] %v378
      %v380 = vmul.f32 %v371, %v371
      %s381 = scalar_lea.vmem %s329, 8
      %v382 = vld [vmem:[%s381] sm:$0x3]
      %v383 = vadd.f32 %v382, %v380
      %384 = vst [vmem:[%s381] sm:$0x3] %v383
      %s385 = scalar_lea.vmem %s336, 8
      %v386 = vld [vmem:[%s385] sm:$0x3]
      %v387 = vadd.f32 %v386, %v374
      %388 = vst [vmem:[%s385] sm:$0x3] %v387
      %s389 = scalar_lea.vmem %s300, 4
      %v390 = vld [vmem:[%s389] sm:$0x3]
      %vm391 = vcmp.eq.s32.totalorder %v354, 2
      %v392 = vsel %vm391, 1, 0
      %v393 = vcvt.s32.f32 %v392
      %v394 = vsel %vm391, %v390, 0.0
      %s395 = scalar_lea.vmem %s322, 16
      %v396 = vld [vmem:[%s395] sm:$0x3]
      %v397 = vadd.f32 %v396, %v394
      %398 = vst [vmem:[%s395] sm:$0x3] %v397
      %v399 = vmul.f32 %v390, %v390
      %s400 = scalar_lea.vmem %s329, 16
      %v401 = vld [vmem:[%s400] sm:$0x3]
      %v402 = vadd.f32 %v401, %v399
      %403 = vst [vmem:[%s400] sm:$0x3] %v402
      %s404 = scalar_lea.vmem %s336, 16
      %v405 = vld [vmem:[%s404] sm:$0x3]
      %v406 = vadd.f32 %v405, %v393
      %407 = vst [vmem:[%s404] sm:$0x3] %v406
      %s408 = scalar_lea.vmem %s300, 6
      %v409 = vld [vmem:[%s408] sm:$0x3]
      %vm410 = vcmp.eq.s32.totalorder %v354, 3
      %v411 = vsel %vm410, 1, 0
      %v412 = vcvt.s32.f32 %v411
      %v413 = vsel %vm410, %v409, 0.0
      %s414 = scalar_lea.vmem %s322, 24
      %v415 = vld [vmem:[%s414] sm:$0x3]
      %v416 = vadd.f32 %v415, %v413
      %417 = vst [vmem:[%s414] sm:$0x3] %v416
      %v418 = vmul.f32 %v409, %v409
      %s419 = scalar_lea.vmem %s329, 24
      %v420 = vld [vmem:[%s419] sm:$0x3]
      %v421 = vadd.f32 %v420, %v418
      %422 = vst [vmem:[%s419] sm:$0x3] %v421
      %s423 = scalar_lea.vmem %s336, 24
      %v424 = vld [vmem:[%s423] sm:$0x3]
      %v425 = vadd.f32 %v424, %v412
      %426 = vst [vmem:[%s423] sm:$0x3] %v425
      %s427 = sadd.s32 %s21, %s22
      %p428 = scmp.lt.s32.totalorder %s427, 1
      %s429 = scalar_select %p428, %s427, 1
      %s430 = smul.addr %s429, 4
      %s431 = smul.addr %s430, 8
      %s432 = scalar_lea.vmem %s2, %s431
      %s433 = sadd.s32 %s21, %s22
      %p434 = scmp.lt.s32.totalorder %s433, 1
      %s435 = scalar_select %p434, %s433, 1
      %s436 = smul.addr %s435, 4
      %s437 = smul.addr %s436, 8
      %s438 = scalar_lea.vmem %s3, %s437
      %s439 = sadd.s32 %s21, %s22
      %p440 = scmp.lt.s32.totalorder %s439, 1
      %s441 = scalar_select %p440, %s439, 1
      %s442 = smul.addr %s441, 4
      %s443 = smul.addr %s442, 8
      %s444 = scalar_lea.vmem %s4, %s443
      // Predicated region
      $region33: #{dice_loss.1} parent=27 // pred_check
        %p445 = pneg %p123
      $region34: #{dice_loss.1} parent=27 // pred_check_branch
        %447 = sbr.rel (%p445) target = $region36
      $region35: #{dice_loss.1} parent=27 // pred_region
        %s448 = sadd.s32 %s21, %s22
      $region36: #{dice_loss.1} parent=27 // pred_fallthru
        _
      // Predicated region
      $region37: #{dice_loss.1} parent=27 // pred_check
        %p449 = pneg %p151
      $region38: #{dice_loss.1} parent=27 // pred_check_branch
        %451 = sbr.rel (%p449) target = $region40
      $region39: #{dice_loss.1} parent=27 // pred_region
        %s452 = sadd.s32 %s21, %s22
      $region40: #{dice_loss.1} parent=27 // pred_fallthru
        _
      // Predicated region
      $region41: #{dice_loss.1} parent=27 // pred_check
        %p453 = pneg %p179
      $region42: #{dice_loss.1} parent=27 // pred_check_branch
        %455 = sbr.rel (%p453) target = $region44
      $region43: #{dice_loss.1} parent=27 // pred_region
        %s456 = sadd.s32 %s21, %s22
      $region44: #{dice_loss.1} parent=27 // pred_fallthru
        _
    $region28: #{dice_loss.1} parent=5 // pred_fallthru
      _
    %p457 = scmp.le.s32.totalorder 2, %s11
    // Predicated region
    $region45: #{dice_loss.1} parent=5 // pred_check
      %p458 = pneg %p457
    $region46: #{dice_loss.1} parent=5 // pred_check_branch
      %460 = sbr.rel (%p458) target = $region48
    $region47: #{dice_loss.1} parent=5 // pred_region
      %s461 = ssub.s32 %s11, 2
      // Predicated region
      $region49: #{dice_loss.1} parent=47 // pred_check
        %p462 = pneg %p129
      $region50: #{dice_loss.1} parent=47 // pred_check_branch
        %464 = sbr.rel (%p462) target = $region52
      $region51: #{dice_loss.1} parent=47 // pred_region
        %s465 = sadd.s32 %s24, %s25
        %p466 = scmp.lt.s32.totalorder %s465, 1
        %s467 = scalar_select %p466, %s465, 1
        %s468 = smul.addr %s467, 4
        %s469 = smul.addr %s468, 8
        %s470 = scalar_lea.vmem %s2, %s469
      $region52: #{dice_loss.1} parent=47 // pred_fallthru
        _
      // Predicated region
      $region53: #{dice_loss.1} parent=47 // pred_check
        %p471 = pneg %p157
      $region54: #{dice_loss.1} parent=47 // pred_check_branch
        %473 = sbr.rel (%p471) target = $region56
      $region55: #{dice_loss.1} parent=47 // pred_region
        %s474 = sadd.s32 %s24, %s25
        %p475 = scmp.lt.s32.totalorder %s474, 1
        %s476 = scalar_select %p475, %s474, 1
        %s477 = smul.addr %s476, 4
        %s478 = smul.addr %s477, 8
        %s479 = scalar_lea.vmem %s3, %s478
      $region56: #{dice_loss.1} parent=47 // pred_fallthru
        _
      // Predicated region
      $region57: #{dice_loss.1} parent=47 // pred_check
        %p480 = pneg %p185
      $region58: #{dice_loss.1} parent=47 // pred_check_branch
        %482 = sbr.rel (%p480) target = $region60
      $region59: #{dice_loss.1} parent=47 // pred_region
        %s483 = sadd.s32 %s24, %s25
        %p484 = scmp.lt.s32.totalorder %s483, 1
        %s485 = scalar_select %p484, %s483, 1
        %s486 = smul.addr %s485, 4
        %s487 = smul.addr %s486, 8
        %s488 = scalar_lea.vmem %s4, %s487
      $region60: #{dice_loss.1} parent=47 // pred_fallthru
        _
    $region48: #{dice_loss.1} parent=5 // pred_fallthru
      _
  $region6: #{dice_loss.1} parent=0 // loop_footer
    %s15 = sadd.s32 1, %s11
  $region7: #{dice_loss.1} parent=0 // loop_footer_branch
    %10 = sbr.rel target = $region3
  $region8: #{dice_loss.1} parent=0 // loop_exit
    _

</llo_original>
